<compile_context>
chip_gen: v6e
topology: v6e:2x2x1
jax: 0.10.0
libtpu: 0.0.40
codegen_flags: <defaults>
</compile_context>

<pallas_src>
import jax
import jax.numpy as jnp
from jax.experimental import pallas as pl
from jax.experimental.pallas import tpu as pltpu


def _vae_kernel(h_ref, eps_ref,
                w_h_ref, b_h_ref,       # fused [encode_11 | encode_12 | decode_1(h-half)]
                wd1z_ref,                # decode_1, z-half
                wd2_ref, bd2_ref,        # decode_2
                out_ref):
    E = eps_ref.shape[-1]
    h = h_ref[...]                                      # (TM, H), matmul dtype

    # Single fused MXU pass over h:  [z_mu | z_lsgms | h@Wd1_h + bd1]
    enc = jnp.dot(h, w_h_ref[...],
                  preferred_element_type=jnp.float32) + b_h_ref[...]
    z_mu = enc[:, :E]                                   # (TM, E) f32
    z_lsgms = enc[:, E:2 * E]                           # (TM, E) f32
    hy = enc[:, 2 * E:]                                 # (TM, E) f32, bd1 folded in

    # Reparameterization (f32): z = eps * exp(0.5 * z_lsgms) + z_mu
    z = eps_ref[...] * jnp.exp(0.5 * z_lsgms) + z_mu

    # decode_1 on concat([h, z], -1) == hy + z @ Wd1_z   (bias already in hy)
    y1 = hy + jnp.dot(z.astype(wd1z_ref.dtype), wd1z_ref[...],
                      preferred_element_type=jnp.float32)
    y1 = jnp.maximum(y1, 0.0)                           # ReLU (f32)

    # decode_2
    y = jnp.dot(y1.astype(wd2_ref.dtype), wd2_ref[...],
                preferred_element_type=jnp.float32) + bd2_ref[...]

    # Single lane-dense output slab: [z_mu | z_lsgms | y]
    out_ref[:, :2 * E] = enc[:, :2 * E]
    out_ref[:, 2 * E:] = y


def _round_up(x, m):
    return ((x + m - 1) // m) * m


def mlp_vae_conditional_forward(h, eps, params, *, tile_rows=1024,
                                matmul_dtype=jnp.bfloat16):
    """h: (B, S, h_size), eps: (B, S, emb). Returns (y, z_mu, z_lsgms)."""
    B, S, H = h.shape
    E = eps.shape[-1]
    Y = params["wd2"].shape[1]
    N = B * S

    # Row-tile alignment: multiple of 8 sublanes, times the per-sublane packing
    # of the streamed matmul dtype (bf16 packs 2 rows / sublane -> 16).
    pack = max(1, 4 // jnp.dtype(matmul_dtype).itemsize)
    row_align = 8 * pack

    # Pick row tiling: big tiles, but keep grid >= 2 (and even) when N allows
    # so the two v7x TensorCores both get work via "parallel" semantics.
    if N >= 16:
        steps = max(2, pl.cdiv(N, tile_rows))
        steps = _round_up(steps, 2)
    else:
        steps = 1
    tile = _round_up(pl.cdiv(N, steps), row_align)
    n_pad = steps * tile

    md = matmul_dtype
    h2 = h.reshape(N, H).astype(md)
    eps2 = eps.reshape(N, E).astype(jnp.float32)
    if n_pad != N:
        h2 = jnp.pad(h2, ((0, n_pad - N), (0, 0)))
        eps2 = jnp.pad(eps2, ((0, n_pad - N), (0, 0)))

    full = lambda shape: pl.BlockSpec(shape, lambda i: (0, 0))
    rows = lambda c: pl.BlockSpec((tile, c), lambda i: (i, 0))

    out = pl.pallas_call(
        _vae_kernel,
        out_shape=jax.ShapeDtypeStruct((n_pad, 2 * E + Y), jnp.float32),
        grid_spec=pltpu.PrefetchScalarGridSpec(
            num_scalar_prefetch=0,
            grid=(steps,),
            in_specs=[
                rows(H),               # h tile (matmul dtype)
                rows(E),               # eps tile (f32)
                full((H, 3 * E)),      # fused weight [w11 | w12 | wd1_h]
                full((1, 3 * E)),      # fused bias   [b11 | b12 | bd1]
                full((E, E)),          # decode_1 weight, z-half
                full((E, Y)),          # decode_2 weight
                full((1, Y)),          # decode_2 bias
            ],
            out_specs=rows(2 * E + Y),
        ),
        compiler_params=pltpu.CompilerParams(
            dimension_semantics=("parallel",)),
    )(h2, eps2,
      params["w_h_all"].astype(md), params["b_h_all"],
      params["wd1_z"].astype(md),
      params["wd2"].astype(md), params["bd2"])

    z_mu = out[:N, :E].reshape(B, S, E)
    z_lsgms = out[:N, E:2 * E].reshape(B, S, E)
    y = out[:N, 2 * E:].reshape(B, S, Y)
    return y, z_mu, z_lsgms


def _xavier_uniform(key, fan_in, fan_out, gain):
    # matches torch.nn.init.xavier_uniform_ (with gain), laid out as (in, out)
    limit = gain * jnp.sqrt(6.0 / (fan_in + fan_out))
    return jax.random.uniform(key, (fan_in, fan_out), jnp.float32,
                              minval=-limit, maxval=limit)


def make_params(key, h_size, embedding_size, y_size):
    gain = jnp.sqrt(2.0)  # calculate_gain('relu')
    keys = jax.random.split(key, 8)

    def bias(k, fan_in, n):
        bound = 1.0 / jnp.sqrt(fan_in)
        return jax.random.uniform(k, (1, n), jnp.float32,
                                  minval=-bound, maxval=bound)

    w11 = _xavier_uniform(keys[0], h_size, embedding_size, gain)
    w12 = _xavier_uniform(keys[1], h_size, embedding_size, gain)
    wd1 = _xavier_uniform(keys[2], h_size + embedding_size, embedding_size, gain)
    wd2 = _xavier_uniform(keys[3], embedding_size, y_size, gain)

    b11 = bias(keys[4], h_size, embedding_size)
    b12 = bias(keys[5], h_size, embedding_size)
    bd1 = bias(keys[6], h_size + embedding_size, embedding_size)

    return {
        # fused [encode_11 | encode_12 | decode_1(h-half)] weight / bias
        "w_h_all": jnp.concatenate([w11, w12, wd1[:h_size, :]], axis=1),
        "b_h_all": jnp.concatenate([b11, b12, bd1], axis=1),
        # decode_1's z-half kept separate so the kernel avoids a lane concat.
        "wd1_z": wd1[h_size:, :],
        "wd2": wd2,
        "bd2": bias(keys[7], embedding_size, y_size),
    }


def _reference_forward(h, eps, params, matmul_dtype=jnp.bfloat16):
    # Pure-JAX mirror of the kernel math (same cast points) for checking.
    md = matmul_dtype
    f32 = jnp.float32
    E = eps.shape[-1]
    hm = h.astype(md)
    enc = jnp.dot(hm, params["w_h_all"].astype(md),
                  preferred_element_type=f32) + params["b_h_all"]
    z_mu, z_lsgms, hy = enc[..., :E], enc[..., E:2 * E], enc[..., 2 * E:]
    z = eps * jnp.exp(0.5 * z_lsgms) + z_mu
    y1 = hy + jnp.dot(z.astype(md), params["wd1_z"].astype(md),
                      preferred_element_type=f32)
    y1 = jnp.maximum(y1, 0.0)
    y = jnp.dot(y1.astype(md), params["wd2"].astype(md),
                preferred_element_type=f32) + params["bd2"]
    return y, z_mu, z_lsgms


if __name__ == "__main__":
    B, S = 2, 8          # batch, sequence
    H, E, Y = 32, 16, 8  # h_size, embedding_size, y_size

    key = jax.random.PRNGKey(0)
    k_h, k_eps, k_p = jax.random.split(key, 3)

    h = jax.random.normal(k_h, (B, S, H), jnp.float32)
    # eps corresponds to torch.randn(...) sampled inside forward(); generated
    # deterministically here and passed into the kernel as an input.
    eps = jax.random.normal(k_eps, (B, S, E), jnp.float32)
    params = make_params(k_p, H, E, Y)

    y, z_mu, z_lsgms = mlp_vae_conditional_forward(h, eps, params)
    jax.block_until_ready((y, z_mu, z_lsgms))

    y_ref, zmu_ref, zls_ref = _reference_forward(h, eps, params)
    assert jnp.allclose(z_mu, zmu_ref, atol=1e-3, rtol=1e-3), "z_mu mismatch"
    assert jnp.allclose(z_lsgms, zls_ref, atol=1e-3, rtol=1e-3), "z_lsgms mismatch"
    assert jnp.allclose(y, y_ref, atol=1e-3, rtol=1e-3), "y mismatch"

    print("KERNEL_OK")
</pallas_src>

<mosaic_0001>
module attributes {stable_mosaic.version = 11 : i64} {
  func.func @_vae_kernel(%arg0: i32, %arg1: memref<16x32xbf16, #tpu.memory_space<vmem>>, %arg2: memref<16x16xf32, #tpu.memory_space<vmem>>, %arg3: memref<32x48xbf16, #tpu.memory_space<vmem>>, %arg4: memref<1x48xf32, #tpu.memory_space<vmem>>, %arg5: memref<16x16xbf16, #tpu.memory_space<vmem>>, %arg6: memref<16x8xbf16, #tpu.memory_space<vmem>>, %arg7: memref<1x8xf32, #tpu.memory_space<vmem>>, %arg8: memref<16x40xf32, #tpu.memory_space<vmem>>) attributes {dimension_semantics = [#tpu.dimension_semantics<parallel>], iteration_bounds = array<i64: 2>, scalar_prefetch = 0 : i64, scratch_operands = 0 : i64, tpu.core_type = #tpu.core_type<tc>, window_params = [{transform_indices = @transform_0, window_bounds = array<i64: 16, 32>}, {transform_indices = @transform_1, window_bounds = array<i64: 16, 16>}, {pipeline_mode = #tpu.pipeline_mode<synchronous>, transform_indices = @transform_2, window_bounds = array<i64: 32, 48>}, {pipeline_mode = #tpu.pipeline_mode<synchronous>, transform_indices = @transform_3, window_bounds = array<i64: 1, 48>}, {pipeline_mode = #tpu.pipeline_mode<synchronous>, transform_indices = @transform_4, window_bounds = array<i64: 16, 16>}, {pipeline_mode = #tpu.pipeline_mode<synchronous>, transform_indices = @transform_5, window_bounds = array<i64: 16, 8>}, {pipeline_mode = #tpu.pipeline_mode<synchronous>, transform_indices = @transform_6, window_bounds = array<i64: 1, 8>}, {transform_indices = @transform_7, window_bounds = array<i64: 16, 40>}]} {
    %c0 = arith.constant 0 : index
    %c0_0 = arith.constant 0 : index
    %0 = vector.load %arg1[%c0, %c0_0] : memref<16x32xbf16, #tpu.memory_space<vmem>>, vector<16x32xbf16>
    %c0_1 = arith.constant 0 : index
    %c0_2 = arith.constant 0 : index
    %1 = vector.load %arg3[%c0_1, %c0_2] : memref<32x48xbf16, #tpu.memory_space<vmem>>, vector<32x48xbf16>
    %cst = arith.constant dense<0.000000e+00> : vector<16x48xf32>
    %2 = tpu.matmul %0, %1, %cst {dimension_numbers = #tpu.dot_dimension_numbers<[1], [0], [0], [1], [0, 0, 1, 1], [], []>} : vector<16x32xbf16>, vector<32x48xbf16>, vector<16x48xf32> -> vector<16x48xf32>
    %c0_3 = arith.constant 0 : index
    %c0_4 = arith.constant 0 : index
    %3 = vector.load %arg4[%c0_3, %c0_4] : memref<1x48xf32, #tpu.memory_space<vmem>>, vector<1x48xf32>
    %4 = vector.broadcast %3 : vector<1x48xf32> to vector<16x48xf32>
    %5 = arith.addf %2, %4 : vector<16x48xf32>
    %6 = vector.extract_strided_slice %5 {offsets = [0, 0], sizes = [16, 16], strides = [1, 1]} : vector<16x48xf32> to vector<16x16xf32>
    %7 = vector.extract_strided_slice %5 {offsets = [0, 16], sizes = [16, 16], strides = [1, 1]} : vector<16x48xf32> to vector<16x16xf32>
    %8 = vector.extract_strided_slice %5 {offsets = [0, 32], sizes = [16, 16], strides = [1, 1]} : vector<16x48xf32> to vector<16x16xf32>
    %c0_5 = arith.constant 0 : index
    %c0_6 = arith.constant 0 : index
    %9 = vector.load %arg2[%c0_5, %c0_6] : memref<16x16xf32, #tpu.memory_space<vmem>>, vector<16x16xf32>
    %cst_7 = arith.constant 5.000000e-01 : f32
    %10 = vector.broadcast %cst_7 : f32 to vector<16x16xf32>
    %11 = arith.mulf %10, %7 : vector<16x16xf32>
    %12 = math.exp %11 : vector<16x16xf32>
    %13 = arith.mulf %9, %12 : vector<16x16xf32>
    %14 = arith.addf %13, %6 : vector<16x16xf32>
    %15 = arith.truncf %14 : vector<16x16xf32> to vector<16x16xbf16>
    %c0_8 = arith.constant 0 : index
    %c0_9 = arith.constant 0 : index
    %16 = vector.load %arg5[%c0_8, %c0_9] : memref<16x16xbf16, #tpu.memory_space<vmem>>, vector<16x16xbf16>
    %cst_10 = arith.constant dense<0.000000e+00> : vector<16x16xf32>
    %17 = tpu.matmul %15, %16, %cst_10 {dimension_numbers = #tpu.dot_dimension_numbers<[1], [0], [0], [1], [0, 0, 1, 1], [], []>} : vector<16x16xbf16>, vector<16x16xbf16>, vector<16x16xf32> -> vector<16x16xf32>
    %18 = arith.addf %8, %17 : vector<16x16xf32>
    %cst_11 = arith.constant 0.000000e+00 : f32
    %19 = vector.broadcast %cst_11 : f32 to vector<16x16xf32>
    %20 = arith.maximumf %18, %19 : vector<16x16xf32>
    %21 = arith.truncf %20 : vector<16x16xf32> to vector<16x16xbf16>
    %c0_12 = arith.constant 0 : index
    %c0_13 = arith.constant 0 : index
    %22 = vector.load %arg6[%c0_12, %c0_13] : memref<16x8xbf16, #tpu.memory_space<vmem>>, vector<16x8xbf16>
    %cst_14 = arith.constant dense<0.000000e+00> : vector<16x8xf32>
    %23 = tpu.matmul %21, %22, %cst_14 {dimension_numbers = #tpu.dot_dimension_numbers<[1], [0], [0], [1], [0, 0, 1, 1], [], []>} : vector<16x16xbf16>, vector<16x8xbf16>, vector<16x8xf32> -> vector<16x8xf32>
    %c0_15 = arith.constant 0 : index
    %c0_16 = arith.constant 0 : index
    %24 = vector.load %arg7[%c0_15, %c0_16] : memref<1x8xf32, #tpu.memory_space<vmem>>, vector<1x8xf32>
    %25 = vector.broadcast %24 : vector<1x8xf32> to vector<16x8xf32>
    %26 = arith.addf %23, %25 : vector<16x8xf32>
    %27 = vector.extract_strided_slice %5 {offsets = [0, 0], sizes = [16, 32], strides = [1, 1]} : vector<16x48xf32> to vector<16x32xf32>
    %c0_17 = arith.constant 0 : index
    %c0_18 = arith.constant 0 : index
    %28 = vector.load %arg8[%c0_17, %c0_18] : memref<16x40xf32, #tpu.memory_space<vmem>>, vector<16x32xf32>
    tpu.vector_store %arg8[%c0_17, %c0_18], %27 {strides = array<i32>} : memref<16x40xf32, #tpu.memory_space<vmem>>, vector<16x32xf32>,
    %c0_19 = arith.constant 0 : index
    %c32 = arith.constant 32 : index
    %29 = vector.load %arg8[%c0_19, %c32] : memref<16x40xf32, #tpu.memory_space<vmem>>, vector<16x8xf32>
    tpu.vector_store %arg8[%c0_19, %c32], %26 {strides = array<i32>} : memref<16x40xf32, #tpu.memory_space<vmem>>, vector<16x8xf32>,
    return
  }
  func.func @transform_0(%arg0: i32) -> (i32, i32) {
    %c0_i32 = arith.constant 0 : i32
    %c0_i32_0 = arith.constant 0 : i32
    return %arg0, %c0_i32 : i32, i32
  }
  func.func @transform_1(%arg0: i32) -> (i32, i32) {
    %c0_i32 = arith.constant 0 : i32
    %c0_i32_0 = arith.constant 0 : i32
    return %arg0, %c0_i32 : i32, i32
  }
  func.func @transform_2(%arg0: i32) -> (i32, i32) {
    %c0_i32 = arith.constant 0 : i32
    %c0_i32_0 = arith.constant 0 : i32
    %c0_i32_1 = arith.constant 0 : i32
    return %c0_i32, %c0_i32_0 : i32, i32
  }
  func.func @transform_3(%arg0: i32) -> (i32, i32) {
    %c0_i32 = arith.constant 0 : i32
    %c0_i32_0 = arith.constant 0 : i32
    %c0_i32_1 = arith.constant 0 : i32
    return %c0_i32, %c0_i32_0 : i32, i32
  }
  func.func @transform_4(%arg0: i32) -> (i32, i32) {
    %c0_i32 = arith.constant 0 : i32
    %c0_i32_0 = arith.constant 0 : i32
    %c0_i32_1 = arith.constant 0 : i32
    return %c0_i32, %c0_i32_0 : i32, i32
  }
  func.func @transform_5(%arg0: i32) -> (i32, i32) {
    %c0_i32 = arith.constant 0 : i32
    %c0_i32_0 = arith.constant 0 : i32
    %c0_i32_1 = arith.constant 0 : i32
    return %c0_i32, %c0_i32_0 : i32, i32
  }
  func.func @transform_6(%arg0: i32) -> (i32, i32) {
    %c0_i32 = arith.constant 0 : i32
    %c0_i32_0 = arith.constant 0 : i32
    %c0_i32_1 = arith.constant 0 : i32
    return %c0_i32, %c0_i32_0 : i32, i32
  }
  func.func @transform_7(%arg0: i32) -> (i32, i32) {
    %c0_i32 = arith.constant 0 : i32
    %c0_i32_0 = arith.constant 0 : i32
    return %arg0, %c0_i32 : i32, i32
  }
}

</mosaic_0001>

<llo_original>
// kernel: tpu_custom_call.1
$region0: #{tpu_custom_call.1}
  #allocation0 [shape = 'u32[]', space=smem, size = 0x4, offset = 0x4, fixed_abs, tag = 'smem constant byte address 0x4 - core index']
  #allocation1 [shape = 'u32[144,128]{1,0:T(1,128)}', space=vmem, size = 0x12000, scoped, tag = 'internal scratch']
  %s0 = inlined_call_operand.vmem [shape: bf16[32,32], index: 0, kind: input, shape index: {}]
  %s1 = inlined_call_operand.vmem [shape: f32[32,16], index: 1, kind: input, shape index: {}]
  %s2 = inlined_call_operand.vmem [shape: bf16[32,48], index: 2, kind: input, shape index: {}]
  %s3 = inlined_call_operand.vmem [shape: f32[1,48], index: 3, kind: input, shape index: {}]
  %s4 = inlined_call_operand.vmem [shape: bf16[16,16], index: 4, kind: input, shape index: {}]
  %s5 = inlined_call_operand.vmem [shape: bf16[16,8], index: 5, kind: input, shape index: {}]
  %s6 = inlined_call_operand.vmem [shape: f32[1,8], index: 6, kind: input, shape index: {}]
  %s7 = inlined_call_operand.hbm [shape: f32[32,40], index: 7, kind: output, shape index: {}]
  %s8 = sld [smem:[#allocation0]]
  $region61: #{tpu_custom_call.1} parent=0
    _
  %s10 = ssub.s32 1, %s8
  %s11 = scalar_select 0, %s10, %s8
  $region1: #{tpu_custom_call.1} parent=0
    #allocation2 [shape = 'u8[16384]{0}', space=vmem, size = 0x4000, scoped, tag = 'output window, operand 0']
    #allocation3 [shape = 's32[2]{0}', space=sflag, size = 0x8, scoped, tag = 'scoped memory for tpu_custom_call.1']
    %12 = vsyncpa [#allocation3], 0
    %s13 = scalar_lea.sflag [#allocation3], 1
    %14 = vsyncpa %s13, 0
    loop: start=0, step=1, limit=4
    $region2: #{tpu_custom_call.1} parent=1 // loop_pre_header
      _
    $region3: #{tpu_custom_call.1} parent=1 // loop_header
      %s16 = sphi 0, %s20
      %p17 = scmp.ge.s32.totalorder %s16, 4
      %s26 = sphi 0, %s28
      %s29 = sphi 0, %s26
      %s30 = sphi 0, %s29
      %s46 = sphi 0, %s30
      %s52 = sphi 0, %s54
      %s55 = sphi 0, %s52
      %s56 = sphi 0, %s55
      %s72 = sphi 0, %s56
      %s76 = sphi 0, %s76
      %s78 = sphi 0, %s76
      %s79 = sphi 0, %s78
      %s93 = sphi 0, %s79
      %s97 = sphi 0, %s97
      %s99 = sphi 0, %s97
      %s100 = sphi 0, %s99
      %s114 = sphi 0, %s100
      %s118 = sphi 0, %s118
      %s120 = sphi 0, %s118
      %s121 = sphi 0, %s120
      %s135 = sphi 0, %s121
      %s139 = sphi 0, %s139
      %s141 = sphi 0, %s139
      %s142 = sphi 0, %s141
      %s156 = sphi 0, %s142
      %s160 = sphi 0, %s160
      %s162 = sphi 0, %s160
      %s163 = sphi 0, %s162
      %s177 = sphi 0, %s163
      %s183 = sphi 0, %s185
      %s186 = sphi 0, %s183
      %s187 = sphi 0, %s186
      %s203 = sphi 0, %s187
    $region4: #{tpu_custom_call.1} parent=1 // loop_header_branch
      %19 = sbr.rel (%p17) target = $region8
    $region5: #{tpu_custom_call.1} parent=1 // loop_body
      %s21 = ssub.s32 %s16, 1
      %s22 = ssub.s32 %s16, 2
      %s23 = sadd.s32 %s16, 1
      %s24 = ssub.s32 %s16, %s23
      %p25 = scmp.eq.s32.totalorder %s24, 0
      %s27 = sadd.s32 %s26, 1
      %s28 = scalar_select %p25, %s26, %s27
      %p31 = pneg %p25
      %p32 = scmp.eq.s32.totalorder %s16, 1
      %p33 = por %p31, %p32
      %p34 = scmp.ne.s32.totalorder %s26, %s29
      %p35 = scmp.eq.s32.totalorder %s16, 0
      %p36 = por %p34, %p35
      %p37 = scmp.ne.s32.totalorder %s26, %s29
      %p38 = scmp.eq.s32.totalorder %s21, 1
      %p39 = por %p37, %p38
      %p40 = scmp.ne.s32.totalorder %s29, %s30
      %p41 = scmp.eq.s32.totalorder %s21, 0
      %p42 = por %p40, %p41
      %p43 = scmp.ne.s32.totalorder %s29, %s30
      %p44 = scmp.eq.s32.totalorder %s22, 1
      %p45 = por %p43, %p44
      %p47 = scmp.ne.s32.totalorder %s30, %s46
      %p48 = scmp.eq.s32.totalorder %s22, 0
      %p49 = por %p47, %p48
      %s50 = ssub.s32 %s16, %s23
      %p51 = scmp.eq.s32.totalorder %s50, 0
      %s53 = sadd.s32 %s52, 1
      %s54 = scalar_select %p51, %s52, %s53
      %p57 = pneg %p51
      %p58 = scmp.eq.s32.totalorder %s16, 1
      %p59 = por %p57, %p58
      %p60 = scmp.ne.s32.totalorder %s52, %s55
      %p61 = scmp.eq.s32.totalorder %s16, 0
      %p62 = por %p60, %p61
      %p63 = scmp.ne.s32.totalorder %s52, %s55
      %p64 = scmp.eq.s32.totalorder %s21, 1
      %p65 = por %p63, %p64
      %p66 = scmp.ne.s32.totalorder %s55, %s56
      %p67 = scmp.eq.s32.totalorder %s21, 0
      %p68 = por %p66, %p67
      %p69 = scmp.ne.s32.totalorder %s55, %s56
      %p70 = scmp.eq.s32.totalorder %s22, 1
      %p71 = por %p69, %p70
      %p73 = scmp.ne.s32.totalorder %s56, %s72
      %p74 = scmp.eq.s32.totalorder %s22, 0
      %p75 = por %p73, %p74
      %s77 = sadd.s32 %s76, 1
      %p80 = scmp.eq.s32.totalorder %s16, 1
      %p81 = scmp.ne.s32.totalorder %s76, %s78
      %p82 = scmp.eq.s32.totalorder %s16, 0
      %p83 = por %p81, %p82
      %p84 = scmp.ne.s32.totalorder %s76, %s78
      %p85 = scmp.eq.s32.totalorder %s21, 1
      %p86 = por %p84, %p85
      %p87 = scmp.ne.s32.totalorder %s78, %s79
      %p88 = scmp.eq.s32.totalorder %s21, 0
      %p89 = por %p87, %p88
      %p90 = scmp.ne.s32.totalorder %s78, %s79
      %p91 = scmp.eq.s32.totalorder %s22, 1
      %p92 = por %p90, %p91
      %p94 = scmp.ne.s32.totalorder %s79, %s93
      %p95 = scmp.eq.s32.totalorder %s22, 0
      %p96 = por %p94, %p95
      %s98 = sadd.s32 %s97, 1
      %p101 = scmp.eq.s32.totalorder %s16, 1
      %p102 = scmp.ne.s32.totalorder %s97, %s99
      %p103 = scmp.eq.s32.totalorder %s16, 0
      %p104 = por %p102, %p103
      %p105 = scmp.ne.s32.totalorder %s97, %s99
      %p106 = scmp.eq.s32.totalorder %s21, 1
      %p107 = por %p105, %p106
      %p108 = scmp.ne.s32.totalorder %s99, %s100
      %p109 = scmp.eq.s32.totalorder %s21, 0
      %p110 = por %p108, %p109
      %p111 = scmp.ne.s32.totalorder %s99, %s100
      %p112 = scmp.eq.s32.totalorder %s22, 1
      %p113 = por %p111, %p112
      %p115 = scmp.ne.s32.totalorder %s100, %s114
      %p116 = scmp.eq.s32.totalorder %s22, 0
      %p117 = por %p115, %p116
      %s119 = sadd.s32 %s118, 1
      %p122 = scmp.eq.s32.totalorder %s16, 1
      %p123 = scmp.ne.s32.totalorder %s118, %s120
      %p124 = scmp.eq.s32.totalorder %s16, 0
      %p125 = por %p123, %p124
      %p126 = scmp.ne.s32.totalorder %s118, %s120
      %p127 = scmp.eq.s32.totalorder %s21, 1
      %p128 = por %p126, %p127
      %p129 = scmp.ne.s32.totalorder %s120, %s121
      %p130 = scmp.eq.s32.totalorder %s21, 0
      %p131 = por %p129, %p130
      %p132 = scmp.ne.s32.totalorder %s120, %s121
      %p133 = scmp.eq.s32.totalorder %s22, 1
      %p134 = por %p132, %p133
      %p136 = scmp.ne.s32.totalorder %s121, %s135
      %p137 = scmp.eq.s32.totalorder %s22, 0
      %p138 = por %p136, %p137
      %s140 = sadd.s32 %s139, 1
      %p143 = scmp.eq.s32.totalorder %s16, 1
      %p144 = scmp.ne.s32.totalorder %s139, %s141
      %p145 = scmp.eq.s32.totalorder %s16, 0
      %p146 = por %p144, %p145
      %p147 = scmp.ne.s32.totalorder %s139, %s141
      %p148 = scmp.eq.s32.totalorder %s21, 1
      %p149 = por %p147, %p148
      %p150 = scmp.ne.s32.totalorder %s141, %s142
      %p151 = scmp.eq.s32.totalorder %s21, 0
      %p152 = por %p150, %p151
      %p153 = scmp.ne.s32.totalorder %s141, %s142
      %p154 = scmp.eq.s32.totalorder %s22, 1
      %p155 = por %p153, %p154
      %p157 = scmp.ne.s32.totalorder %s142, %s156
      %p158 = scmp.eq.s32.totalorder %s22, 0
      %p159 = por %p157, %p158
      %s161 = sadd.s32 %s160, 1
      %p164 = scmp.eq.s32.totalorder %s16, 1
      %p165 = scmp.ne.s32.totalorder %s160, %s162
      %p166 = scmp.eq.s32.totalorder %s16, 0
      %p167 = por %p165, %p166
      %p168 = scmp.ne.s32.totalorder %s160, %s162
      %p169 = scmp.eq.s32.totalorder %s21, 1
      %p170 = por %p168, %p169
      %p171 = scmp.ne.s32.totalorder %s162, %s163
      %p172 = scmp.eq.s32.totalorder %s21, 0
      %p173 = por %p171, %p172
      %p174 = scmp.ne.s32.totalorder %s162, %s163
      %p175 = scmp.eq.s32.totalorder %s22, 1
      %p176 = por %p174, %p175
      %p178 = scmp.ne.s32.totalorder %s163, %s177
      %p179 = scmp.eq.s32.totalorder %s22, 0
      %p180 = por %p178, %p179
      %s181 = ssub.s32 %s16, %s23
      %p182 = scmp.eq.s32.totalorder %s181, 0
      %s184 = sadd.s32 %s183, 1
      %s185 = scalar_select %p182, %s183, %s184
      %p188 = pneg %p182
      %p189 = scmp.eq.s32.totalorder %s16, 1
      %p190 = por %p188, %p189
      %p191 = scmp.ne.s32.totalorder %s183, %s186
      %p192 = scmp.eq.s32.totalorder %s16, 0
      %p193 = por %p191, %p192
      %p194 = scmp.ne.s32.totalorder %s183, %s186
      %p195 = scmp.eq.s32.totalorder %s21, 1
      %p196 = por %p194, %p195
      %p197 = scmp.ne.s32.totalorder %s186, %s187
      %p198 = scmp.eq.s32.totalorder %s21, 0
      %p199 = por %p197, %p198
      %p200 = scmp.ne.s32.totalorder %s186, %s187
      %p201 = scmp.eq.s32.totalorder %s22, 1
      %p202 = por %p200, %p201
      %p204 = scmp.ne.s32.totalorder %s187, %s203
      %p205 = scmp.eq.s32.totalorder %s22, 0
      %p206 = por %p204, %p205
      %p207 = scmp.le.s32.totalorder 1, %s16
      %p208 = scmp.lt.s32.totalorder %s16, 3
      %p209 = pnand %p207, %p208
      %p210 = pneg %p209
      // Predicated region
      $region9: #{tpu_custom_call.1} parent=5 // pred_check
        _
      $region10: #{tpu_custom_call.1} parent=5 // pred_check_branch
        %212 = sbr.rel (%p209) target = $region12
      $region11: #{tpu_custom_call.1} parent=5 // pred_region
        %s213 = ssub.s32 %s16, 1
        // Predicated region
        $region13: #{tpu_custom_call.1} parent=11 // pred_check
          %p214 = pneg %p89
        $region14: #{tpu_custom_call.1} parent=11 // pred_check_branch
          %216 = sbr.rel (%p214) target = $region16
        $region15: #{tpu_custom_call.1} parent=11 // pred_region
          _
        $region16: #{tpu_custom_call.1} parent=11 // pred_fallthru
          _
        // Predicated region
        $region17: #{tpu_custom_call.1} parent=11 // pred_check
          %p217 = pneg %p110
        $region18: #{tpu_custom_call.1} parent=11 // pred_check_branch
          %219 = sbr.rel (%p217) target = $region20
        $region19: #{tpu_custom_call.1} parent=11 // pred_region
          _
        $region20: #{tpu_custom_call.1} parent=11 // pred_fallthru
          _
        // Predicated region
        $region21: #{tpu_custom_call.1} parent=11 // pred_check
          %p220 = pneg %p131
        $region22: #{tpu_custom_call.1} parent=11 // pred_check_branch
          %222 = sbr.rel (%p220) target = $region24
        $region23: #{tpu_custom_call.1} parent=11 // pred_region
          _
        $region24: #{tpu_custom_call.1} parent=11 // pred_fallthru
          _
        // Predicated region
        $region25: #{tpu_custom_call.1} parent=11 // pred_check
          %p223 = pneg %p152
        $region26: #{tpu_custom_call.1} parent=11 // pred_check_branch
          %225 = sbr.rel (%p223) target = $region28
        $region27: #{tpu_custom_call.1} parent=11 // pred_region
          _
        $region28: #{tpu_custom_call.1} parent=11 // pred_fallthru
          _
        // Predicated region
        $region29: #{tpu_custom_call.1} parent=11 // pred_check
          %p226 = pneg %p173
        $region30: #{tpu_custom_call.1} parent=11 // pred_check_branch
          %228 = sbr.rel (%p226) target = $region32
        $region31: #{tpu_custom_call.1} parent=11 // pred_region
          _
        $region32: #{tpu_custom_call.1} parent=11 // pred_fallthru
          _
      $region12: #{tpu_custom_call.1} parent=5 // pred_fallthru
        _
      %p229 = scmp.lt.s32.totalorder %s16, 2
      // Predicated region
      $region33: #{tpu_custom_call.1} parent=5 // pred_check
        %p230 = pneg %p229
      $region34: #{tpu_custom_call.1} parent=5 // pred_check_branch
        %232 = sbr.rel (%p230) target = $region36
      $region35: #{tpu_custom_call.1} parent=5 // pred_region
        // Predicated region
        $region37: #{tpu_custom_call.1} parent=35 // pred_check
          %p233 = pneg %p36
        $region38: #{tpu_custom_call.1} parent=35 // pred_check_branch
          %235 = sbr.rel (%p233) target = $region40
        $region39: #{tpu_custom_call.1} parent=35 // pred_region
          %s236 = smul.u32 2, %s16
          %p237 = scmp.lt.s32.totalorder %s236, 3
          %s238 = scalar_select %p237, %s236, 3
          %s239 = smul.addr %s238, 4
          %s240 = scalar_lea.vmem %s0, %s239
          %s241 = smul.u32 2, %s16
        $region40: #{tpu_custom_call.1} parent=35 // pred_fallthru
          _
        // Predicated region
        $region41: #{tpu_custom_call.1} parent=35 // pred_check
          %p242 = pneg %p62
        $region42: #{tpu_custom_call.1} parent=35 // pred_check_branch
          %244 = sbr.rel (%p242) target = $region44
        $region43: #{tpu_custom_call.1} parent=35 // pred_region
          %s245 = smul.u32 2, %s16
          %p246 = scmp.lt.s32.totalorder %s245, 3
          %s247 = scalar_select %p246, %s245, 3
          %s248 = smul.addr %s247, 8
          %s249 = scalar_lea.vmem %s1, %s248
          %s250 = smul.u32 2, %s16
        $region44: #{tpu_custom_call.1} parent=35 // pred_fallthru
          _
      $region36: #{tpu_custom_call.1} parent=5 // pred_fallthru
        _
      %p251 = scmp.le.s32.totalorder 1, %s16
      %p252 = scmp.lt.s32.totalorder %s16, 3
      %p253 = pnand %p251, %p252
      %p254 = pneg %p253
      // Predicated region
      $region45: #{tpu_custom_call.1} parent=5 // pred_check
        _
      $region46: #{tpu_custom_call.1} parent=5 // pred_check_branch
        %256 = sbr.rel (%p253) target = $region48
      $region47: #{tpu_custom_call.1} parent=5 // pred_region
        %s257 = ssub.s32 %s16, 1
        %s258 = smul.u32 2, %s21
        %p259 = scmp.lt.s32.totalorder %s258, 3
        %s260 = scalar_select %p259, %s258, 3
        %s261 = smul.addr %s260, 4
        %s262 = scalar_lea.vmem %s0, %s261
        %p263 = pneg %p42
        %p264 = pneg %p39
        %s265 = smul.u32 2, %s21
        %p266 = scmp.lt.s32.totalorder %s265, 3
        %s267 = scalar_select %p266, %s265, 3
        %s268 = smul.addr %s267, 8
        %s269 = scalar_lea.vmem %s1, %s268
        %p270 = pneg %p68
        %p271 = pneg %p65
        %p272 = pneg %p89
        %p273 = pneg %p86
        %p274 = pneg %p110
        %p275 = pneg %p107
        %p276 = pneg %p131
        %p277 = pneg %p128
        %p278 = pneg %p152
        %p279 = pneg %p149
        %p280 = pneg %p173
        %p281 = pneg %p170
        %p282 = pneg %p199
        %p283 = pneg %p196
        %s284 = sand.u32 %s186, 1
        %s285 = scalar_lea.sflag [#allocation3], %s284
        %s286 = sand.u32 %s186, 1
        %s287 = smul.addr %s286, 16
        %s288 = scalar_lea.vmem [#allocation2], %s287
        %s289 = smul.u32 2, %s21
        %p290 = scmp.lt.s32.totalorder %s289, 3
        %s291 = scalar_select %p290, %s289, 3
        %s292 = smul.addr %s291, 4
        %s293 = scalar_lea.vmem %s0, %s292
        %s294 = smul.u32 2, %s21
        %s295 = smul.u32 2, %s21
        %p296 = scmp.lt.s32.totalorder %s295, 3
        %s297 = scalar_select %p296, %s295, 3
        %s298 = smul.addr %s297, 8
        %s299 = scalar_lea.vmem %s1, %s298
        %s300 = smul.u32 2, %s21
        %s301 = smul.u32 2, %s21
        %v303 = vld [vmem:[%s293] sm:$0xf]
        %v304 = vld [vmem:[%s293 + $0x4] sm:$0xf]
        %v305 = vld [vmem:[%s2] sm:$0xf]
        %v306 = vld [vmem:[%s2 + $0x4] sm:$0xf]
        %v307 = vld [vmem:[%s2 + $0x8] sm:$0xf]
        %v308 = vld [vmem:[%s2 + $0xc] sm:$0xf]
        %v309 = vld [vmem:[%s3] sm:$0x1]
        %v311 = vlaneseq
        %v312 = vshrl.u32 %v311, 7
        %v313 = vsub.s32 0, %v312
        %v314 = vrot.slane %v309, %v313
        %v318 = vunpack.c.l.b16 %v303
        %v319 = vunpack.c.l.b16 %v304
        %v320 = vpack.c.b16 %v319, %v318
        %v325 = vunpack.c.l.b16 %v305
        %v326 = vunpack.c.l.b16 %v306
        %v327 = vunpack.c.l.b16 %v307
        %v328 = vunpack.c.l.b16 %v308
        %v329 = vpack.c.b16 %v326, %v325
        %v330 = vpack.c.b16 %v328, %v327
        %vm333 = vcmask 261120
        %v335 = vsel %vm333, %v320, 0
        %337 = vmatprep.subr.bf16.mxu0 0
        %338 = vmatpush1.bf16.msra.mxu0 0
        %339 = vmatprep.subr.bf16.mxu0 0
        %340 = vmatpush1.bf16.msra.mxu0 0
        %341 = vmatprep.subr.bf16.mxu0 0
        %342 = vmatpush1.bf16.msra.mxu0 0
        %343 = vmatprep.subr.bf16.mxu0 0
        %344 = vmatpush1.bf16.msra.mxu0 0
        %345 = vmatprep.subr.bf16.mxu0 0
        %346 = vmatpush1.bf16.msra.mxu0 0
        %347 = vmatprep.subr.bf16.mxu0 0
        %348 = vmatpush1.bf16.msra.mxu0 0
        %349 = vmatprep.subr.bf16.mxu0 0
        %350 = vmatpush1.bf16.msra.mxu0 %v330
        %351 = vmatprep.subr.bf16.mxu0 0
        %352 = vmatpush1.bf16.msra.mxu0 %v329
        %353 = vmatprep.subr.bf16.mxu0 0
        %354 = vmatpush2.bf16.msra.mxu0 0
        %355 = vmatprep.subr.bf16.mxu0 0
        %356 = vmatpush2.bf16.msra.mxu0 0
        %357 = vmatprep.subr.bf16.mxu0 0
        %358 = vmatpush2.bf16.msra.mxu0 0
        %359 = vmatprep.subr.bf16.mxu0 0
        %360 = vmatpush2.bf16.msra.mxu0 0
        %361 = vmatprep.subr.bf16.mxu0 0
        %362 = vmatpush2.bf16.msra.mxu0 0
        %363 = vmatprep.subr.bf16.mxu0 0
        %364 = vmatpush2.bf16.msra.mxu0 0
        %365 = vmatprep.subr.bf16.mxu0 0
        %366 = vmatpush2.bf16.msra.mxu0 0
        %367 = vmatprep.subr.bf16.mxu0 0
        %368 = vmatpush2.bf16.msra.mxu0 0
        %369 = vmatprep.mubr.bf16.mxu0 0
        %370 = vmatmul.mubr.bf16.gmra.mxu0 %v335
        %v371 = vpop.f32.mrf.mxu0
        %v372 = vadd.f32 %v314, %v371
        %v373 = vpop.f32.mrf.mxu0
        %v374 = vpop.f32.mrf.mxu0
        %v375 = vadd.f32 %v314, %v374
        %v376 = vpop.f32.mrf.mxu0
        %377 = vdwg.mxu0
        %v378 = vld [vmem:[%s299] sm:$0xff]
        %v379 = vld [vmem:[%s299 + $0x8] sm:$0xff]
        %v380 = vmul.f32 %v372, 0.5
        %v381 = vmul.f32 %v375, 0.5
        %v382 = vmul.f32 %v380, 1.442695
        %v383 = vpow.pop %v382
        %v384 = vmul.f32 %v381, 1.442695
        %v385 = vpow.pop %v384
        %388 = vrot.lane.b32.xlu0 %v383, 112
        %v389 = vpop.permute.xlu0 %388
        %390 = vrot.lane.b32.xlu0 %v385, 112
        %v391 = vpop.permute.xlu0 %390
        %v394 = vmul.f32 %v378, %v389
        %v395 = vmul.f32 %v379, %v391
        %v396 = vadd.f32 %v394, %v372
        %v397 = vadd.f32 %v395, %v375
        %v398 = vpack.c.bf16 %v397, %v396
        %v399 = vld [vmem:[%s4] sm:$0xf]
        %v400 = vld [vmem:[%s4 + $0x4] sm:$0xf]
        %v403 = vunpack.c.l.b16 %v399
        %v404 = vunpack.c.l.b16 %v400
        %v405 = vpack.c.b16 %v404, %v403
        %vm407 = vcmask 130048
        %v409 = vsel %vm407, %v398, 0
        %411 = vmatprep.subr.bf16.mxu0 0
        %412 = vmatpush1.bf16.msra.mxu0 0
        %413 = vmatprep.subr.bf16.mxu0 0
        %414 = vmatpush1.bf16.msra.mxu0 0
        %415 = vmatprep.subr.bf16.mxu0 0
        %416 = vmatpush1.bf16.msra.mxu0 0
        %417 = vmatprep.subr.bf16.mxu0 0
        %418 = vmatpush1.bf16.msra.mxu0 0
        %419 = vmatprep.subr.bf16.mxu0 0
        %420 = vmatpush1.bf16.msra.mxu0 0
        %421 = vmatprep.subr.bf16.mxu0 0
        %422 = vmatpush1.bf16.msra.mxu0 0
        %423 = vmatprep.subr.bf16.mxu0 0
        %424 = vmatpush1.bf16.msra.mxu0 0
        %425 = vmatprep.subr.bf16.mxu0 0
        %426 = vmatpush1.bf16.msra.mxu0 %v405
        %427 = vmatprep.subr.bf16.mxu0 0
        %428 = vmatpush2.bf16.msra.mxu0 0
        %429 = vmatprep.subr.bf16.mxu0 0
        %430 = vmatpush2.bf16.msra.mxu0 0
        %431 = vmatprep.subr.bf16.mxu0 0
        %432 = vmatpush2.bf16.msra.mxu0 0
        %433 = vmatprep.subr.bf16.mxu0 0
        %434 = vmatpush2.bf16.msra.mxu0 0
        %435 = vmatprep.subr.bf16.mxu0 0
        %436 = vmatpush2.bf16.msra.mxu0 0
        %437 = vmatprep.subr.bf16.mxu0 0
        %438 = vmatpush2.bf16.msra.mxu0 0
        %439 = vmatprep.subr.bf16.mxu0 0
        %440 = vmatpush2.bf16.msra.mxu0 0
        %441 = vmatprep.subr.bf16.mxu0 0
        %442 = vmatpush2.bf16.msra.mxu0 0
        %443 = vmatprep.mubr.bf16.mxu0 0
        %444 = vmatmul.mubr.bf16.gmra.mxu0 %v409
        %v445 = vpop.f32.mrf.mxu0
        %v446 = vadd.f32 0.0, %v445
        %v447 = vpop.f32.mrf.mxu0
        %v448 = vpop.f32.mrf.mxu0
        %v449 = vadd.f32 0.0, %v448
        %v450 = vpop.f32.mrf.mxu0
        %451 = vdwg.mxu0
        %454 = vrot.lane.b32.xlu0 %v446, 32
        %v455 = vpop.permute.xlu0 %454
        %456 = vrot.lane.b32.xlu0 %v449, 32
        %v457 = vpop.permute.xlu0 %456
        %v460 = vadd.f32 %v372, %v455
        %v461 = vadd.f32 %v375, %v457
        %v462 = vmax.f32 %v460, 0.0
        %v463 = vmax.f32 %v461, 0.0
        %v464 = vpack.c.bf16 %v463, %v462
        %v465 = vld [vmem:[%s5] sm:$0xf]
        %v466 = vld [vmem:[%s5 + $0x4] sm:$0xf]
        %v467 = vld [vmem:[%s6] sm:$0x1]
        %v469 = vlaneseq
        %v470 = vshrl.u32 %v469, 7
        %v471 = vsub.s32 0, %v470
        %v472 = vrot.slane %v467, %v471
        %475 = vrot.lane.b32.xlu0 %v464, 96
        %v476 = vpop.permute.xlu0 %475
        %v479 = vunpack.c.l.b16 %v465
        %v480 = vunpack.c.l.b16 %v466
        %v481 = vpack.c.b16 %v480, %v479
        %v484 = vsel %vm407, %v476, 0
        %486 = vmatprep.subr.bf16.mxu0 0
        %487 = vmatpush1.bf16.msra.mxu0 0
        %488 = vmatprep.subr.bf16.mxu0 0
        %489 = vmatpush1.bf16.msra.mxu0 0
        %490 = vmatprep.subr.bf16.mxu0 0
        %491 = vmatpush1.bf16.msra.mxu0 0
        %492 = vmatprep.subr.bf16.mxu0 0
        %493 = vmatpush1.bf16.msra.mxu0 0
        %494 = vmatprep.subr.bf16.mxu0 0
        %495 = vmatpush1.bf16.msra.mxu0 0
        %496 = vmatprep.subr.bf16.mxu0 0
        %497 = vmatpush1.bf16.msra.mxu0 0
        %498 = vmatprep.subr.bf16.mxu0 0
        %499 = vmatpush1.bf16.msra.mxu0 0
        %500 = vmatprep.subr.bf16.mxu0 0
        %501 = vmatpush1.bf16.msra.mxu0 %v481
        %502 = vmatprep.subr.bf16.mxu0 0
        %503 = vmatpush2.bf16.msra.mxu0 0
        %504 = vmatprep.subr.bf16.mxu0 0
        %505 = vmatpush2.bf16.msra.mxu0 0
        %506 = vmatprep.subr.bf16.mxu0 0
        %507 = vmatpush2.bf16.msra.mxu0 0
        %508 = vmatprep.subr.bf16.mxu0 0
        %509 = vmatpush2.bf16.msra.mxu0 0
        %510 = vmatprep.subr.bf16.mxu0 0
        %511 = vmatpush2.bf16.msra.mxu0 0
        %512 = vmatprep.subr.bf16.mxu0 0
        %513 = vmatpush2.bf16.msra.mxu0 0
        %514 = vmatprep.subr.bf16.mxu0 0
        %515 = vmatpush2.bf16.msra.mxu0 0
        %516 = vmatprep.subr.bf16.mxu0 0
        %517 = vmatpush2.bf16.msra.mxu0 0
        %518 = vmatprep.mubr.bf16.mxu0 0
        %519 = vmatmul.mubr.bf16.gmra.mxu0 %v484
        %v520 = vpop.f32.mrf.mxu0
        %v521 = vadd.f32 %v472, %v520
        %v522 = vpop.f32.mrf.mxu0
        %v523 = vpop.f32.mrf.mxu0
        %v524 = vadd.f32 %v472, %v523
        %v525 = vpop.f32.mrf.mxu0
        %526 = vdwg.mxu0
        %527 = vst.msk [vmem:[%s288] sm:$0xff] %vm333, %v372
        %528 = vst.msk [vmem:[%s288 + $0x8] sm:$0xff] %vm333, %v375
        %531 = vrot.lane.b32.xlu0 %v521, 32
        %v532 = vpop.permute.xlu0 %531
        %533 = vrot.lane.b32.xlu0 %v524, 32
        %v534 = vpop.permute.xlu0 %533
        %vm537 = vcmask 326912
        %538 = vst.msk [vmem:[%s288] sm:$0xff] %vm537, %v532
        %539 = vst.msk [vmem:[%s288 + $0x8] sm:$0xff] %vm537, %v534
        %s540 = sand.u32 %s186, 1
        %s541 = scalar_lea.sflag [#allocation3], %s540
        %s542 = sand.u32 %s186, 1
        %s543 = smul.addr %s542, 16
        %s544 = scalar_lea.vmem [#allocation2], %s543
        // Predicated region
        $region49: #{tpu_custom_call.1} parent=47 // pred_check
          %p545 = pneg %p196
        $region50: #{tpu_custom_call.1} parent=47 // pred_check_branch
          %547 = sbr.rel (%p545) target = $region52
        $region51: #{tpu_custom_call.1} parent=47 // pred_region
          %s548 = smul.u32 2, %s21
          %s550 = ssub.s32 256, 256
          %551 = vsyncadd %s541, %s550
          %s552 = smul.addr %s548, 128
          %s553 = scalar_lea.hbm %s7, %s552
          %s554 = sshll.u32 %s544, 4
          %s555 = int_to_ptr.vmem [resolvable:$true] %s554
          %560 = dma.vmem_to_hbm [thread:$0]  %s555, 256, %s553, %s541, 128, 128, 8
        $region52: #{tpu_custom_call.1} parent=47 // pred_fallthru
          _
      $region48: #{tpu_custom_call.1} parent=5 // pred_fallthru
        _
      %p561 = scmp.le.s32.totalorder 2, %s16
      // Predicated region
      $region53: #{tpu_custom_call.1} parent=5 // pred_check
        %p562 = pneg %p561
      $region54: #{tpu_custom_call.1} parent=5 // pred_check_branch
        %564 = sbr.rel (%p562) target = $region56
      $region55: #{tpu_custom_call.1} parent=5 // pred_region
        %s565 = ssub.s32 %s16, 2
        // Predicated region
        $region57: #{tpu_custom_call.1} parent=55 // pred_check
          %p566 = pneg %p202
        $region58: #{tpu_custom_call.1} parent=55 // pred_check_branch
          %568 = sbr.rel (%p566) target = $region60
        $region59: #{tpu_custom_call.1} parent=55 // pred_region
          %s569 = sand.u32 %s187, 1
          %s570 = scalar_lea.sflag [#allocation3], %s569
          %s571 = sand.u32 %s187, 1
          %s572 = smul.addr %s571, 16
          %s573 = scalar_lea.vmem [#allocation2], %s572
          %574 = dma.done %s570, 256
        $region60: #{tpu_custom_call.1} parent=55 // pred_fallthru
          _
      $region56: #{tpu_custom_call.1} parent=5 // pred_fallthru
        _
    $region6: #{tpu_custom_call.1} parent=1 // loop_footer
      %s20 = sadd.s32 1, %s16
    $region7: #{tpu_custom_call.1} parent=1 // loop_footer_branch
      %15 = sbr.rel target = $region3
    $region8: #{tpu_custom_call.1} parent=1 // loop_exit
      _
    %575 = vsyncpa [#allocation3], 1
    %s576 = scalar_lea.sflag [#allocation3], 1
    %577 = vsyncpa %s576, 1

</llo_original>
